<compile_context>
chip_gen: v7x
topology: tpu7x:2x2x1
jax: 0.10.0
libtpu: 0.0.40
codegen_flags: <defaults>
</compile_context>

<pallas_src>
import functools

import jax
import jax.numpy as jnp
from jax import lax
from jax.experimental import pallas as pl
from jax.experimental.pallas import tpu as pltpu


def _round_up(x, m):
    return (x + m - 1) // m * m


def _proxy_nca_kernel(emb_ref, lab_ref, prox_ref, out_ref, pnorm_ref, *,
                      softmax_scale, n_valid, n_rows_padded, n_classes,
                      block_rows):
    i = pl.program_id(0)

    # --- one-time init: normalize proxies into resident VMEM scratch, zero acc ---
    @pl.when(i == 0)
    def _init():
        p = prox_ref[...]                                    # (Cp, Dp) f32
        psq = jnp.sum(p * p, axis=-1, keepdims=True)
        pnorm_ref[...] = p * lax.rsqrt(jnp.maximum(psq, 1e-24))
        out_ref[...] = jnp.zeros_like(out_ref)

    # --- normalize this row block (rsqrt -> EUP slot) ---
    x = emb_ref[...]                                         # (TB, Dp) f32
    xsq = jnp.sum(x * x, axis=-1, keepdims=True)
    xn = x * lax.rsqrt(jnp.maximum(xsq, 1e-24))

    # --- gram[i, c] = <xn_i, pn_c>; contract D on both sides (no transpose) ---
    gram = lax.dot_general(
        xn, pnorm_ref[...],
        dimension_numbers=(((1,), (1,)), ((), ())),
        preferred_element_type=jnp.float32)                  # (TB, Cp)

    # logits = -scale * (2 - 2*gram); CE is shift invariant -> drop the constant.
    logits = (2.0 * softmax_scale) * gram

    tb, cp = logits.shape
    col = lax.broadcasted_iota(jnp.int32, (tb, cp), 1)
    if cp != n_classes:                                      # static: only if padded
        logits = jnp.where(col < n_classes, logits, -1e30)

    lab = lab_ref[...]                                       # (TB, 1) int32
    onehot = (col == lab).astype(jnp.float32)

    # --- stable per-row cross entropy ---
    row_max = jnp.max(logits, axis=-1, keepdims=True)
    sumexp = jnp.sum(jnp.exp(logits - row_max), axis=-1, keepdims=True)
    lse = jnp.log(sumexp) + row_max
    tgt = jnp.sum(logits * onehot, axis=-1, keepdims=True)
    ce = lse - tgt                                           # (TB, 1)

    if n_rows_padded != n_valid:                             # static: only if padded
        row = i * block_rows + lax.broadcasted_iota(jnp.int32, (tb, 1), 0)
        ce = ce * (row < n_valid).astype(jnp.float32)

    # --- accumulate into resident (1,1) output block ---
    out_ref[...] = out_ref[...] + jnp.sum(ce)

    @pl.when(i == pl.num_programs(0) - 1)
    def _finalize():
        out_ref[...] = out_ref[...] * (1.0 / n_valid)


def proxy_nca_loss(embeddings, labels, proxies, softmax_scale=32.0,
                   block_rows=128):
    """embeddings: (N, D), labels: (N,) int, proxies: (C, D) -> scalar f32 loss."""
    n, d = embeddings.shape
    c, d2 = proxies.shape
    assert d == d2, (d, d2)

    dp = _round_up(d, 128)                   # lane-pad contraction dim
    cp = _round_up(c, 128)                   # lane-pad class dim (masked in-kernel)
    tb = min(block_rows, _round_up(n, 8))    # row block, sublane-aligned
    n_pad = _round_up(n, tb)

    emb = jnp.zeros((n_pad, dp), jnp.float32).at[:n, :d].set(
        embeddings.astype(jnp.float32))
    prox = jnp.zeros((cp, dp), jnp.float32).at[:c, :d].set(
        proxies.astype(jnp.float32))
    lab = jnp.zeros((n_pad, 1), jnp.int32).at[:n, 0].set(
        labels.astype(jnp.int32))

    kernel = functools.partial(
        _proxy_nca_kernel,
        softmax_scale=float(softmax_scale),
        n_valid=n, n_rows_padded=n_pad, n_classes=c, block_rows=tb)

    out = pl.pallas_call(
        kernel,
        out_shape=jax.ShapeDtypeStruct((1, 1), jnp.float32),
        grid_spec=pltpu.PrefetchScalarGridSpec(
            num_scalar_prefetch=0,
            grid=(n_pad // tb,),
            in_specs=[
                pl.BlockSpec((tb, dp), lambda i: (i, 0)),   # embedding row block
                pl.BlockSpec((tb, 1), lambda i: (i, 0)),    # label column block
                pl.BlockSpec((cp, dp), lambda i: (0, 0)),   # proxies, resident
            ],
            out_specs=pl.BlockSpec((1, 1), lambda i: (0, 0)),
            scratch_shapes=[pltpu.VMEM((cp, dp), jnp.float32)],  # normalized proxies
        ),
        compiler_params=pltpu.CompilerParams(
            dimension_semantics=("arbitrary",)),
    )(emb, lab, prox)
    return out[0, 0]


class ProxyNCA:
    """Mirror of the PyTorch Proxy_NCA module (proxies are the learned param)."""

    def __init__(self, nb_classes, sz_embed, scale=32, key=None):
        self.nb_classes = nb_classes
        self.sz_embed = sz_embed
        self.scale = float(scale)
        key = jax.random.PRNGKey(0) if key is None else key
        self.proxies = jax.random.normal(key, (nb_classes, sz_embed),
                                         dtype=jnp.float32)

    def __call__(self, embeddings, labels):
        return proxy_nca_loss(embeddings, labels, self.proxies,
                              softmax_scale=self.scale)


def _reference_proxy_nca(embeddings, labels, proxies, softmax_scale=32.0):
    """Plain-JAX reference (PML ProxyNCALoss with default MeanReducer)."""
    x = embeddings.astype(jnp.float32)
    p = proxies.astype(jnp.float32)
    xn = x / jnp.maximum(jnp.linalg.norm(x, axis=-1, keepdims=True), 1e-12)
    pn = p / jnp.maximum(jnp.linalg.norm(p, axis=-1, keepdims=True), 1e-12)
    d2 = jnp.sum((xn[:, None, :] - pn[None, :, :]) ** 2, axis=-1)   # (N, C)
    logits = -softmax_scale * d2
    lse = jax.scipy.special.logsumexp(logits, axis=-1)
    tgt = jnp.take_along_axis(
        logits, labels[:, None].astype(jnp.int32), axis=-1)[:, 0]
    return jnp.mean(lse - tgt)


if __name__ == "__main__":
    key = jax.random.PRNGKey(0)
    k_emb, k_lab, k_prox = jax.random.split(key, 3)

    N, D, C, SCALE = 32, 64, 16, 32.0     # batch=32, sz_embed=64, nb_classes=16
    embeddings = jax.random.normal(k_emb, (N, D), dtype=jnp.float32)
    labels = jax.random.randint(k_lab, (N,), 0, C, dtype=jnp.int32)

    module = ProxyNCA(nb_classes=C, sz_embed=D, scale=SCALE, key=k_prox)
    loss = module(embeddings, labels)
    loss = jax.block_until_ready(loss)

    ref = jax.block_until_ready(
        _reference_proxy_nca(embeddings, labels, module.proxies, SCALE))
    assert jnp.allclose(loss, ref, atol=1e-4, rtol=1e-4), (loss, ref)

    print("KERNEL_OK")
</pallas_src>

<mosaic_0001>
module attributes {stable_mosaic.version = 11 : i64} {
  func.func @_proxy_nca_kernel(%arg0: i32, %arg1: memref<32x128xf32, #tpu.memory_space<vmem>>, %arg2: memref<32x1xi32, #tpu.memory_space<vmem>>, %arg3: memref<128x128xf32, #tpu.memory_space<vmem>>, %arg4: memref<1x1xf32, #tpu.memory_space<vmem>>, %arg5: memref<128x128xf32, #tpu.memory_space<vmem>>) attributes {dimension_semantics = [#tpu.dimension_semantics<arbitrary>], iteration_bounds = array<i64: 1>, scalar_prefetch = 0 : i64, scratch_operands = 1 : i64, tpu.core_type = #tpu.core_type<tc>, window_params = [{transform_indices = @transform_0, window_bounds = array<i64: 32, 128>}, {transform_indices = @transform_1, window_bounds = array<i64: 32, 1>}, {pipeline_mode = #tpu.pipeline_mode<synchronous>, transform_indices = @transform_2, window_bounds = array<i64: 128, 128>}, {pipeline_mode = #tpu.pipeline_mode<synchronous>, transform_indices = @transform_3, window_bounds = array<i64: 1, 1>}]} {
    %c0_i32 = arith.constant 0 : i32
    %0 = arith.cmpi eq, %arg0, %c0_i32 : i32
    %1 = arith.extui %0 : i1 to i32
    %c0_i32_0 = arith.constant 0 : i32
    %2 = arith.cmpi ne, %1, %c0_i32_0 : i32
    scf.if %2 {
      %c0_20 = arith.constant 0 : index
      %c0_21 = arith.constant 0 : index
      %50 = vector.load %arg3[%c0_20, %c0_21] : memref<128x128xf32, #tpu.memory_space<vmem>>, vector<128x128xf32>
      %51 = arith.mulf %50, %50 : vector<128x128xf32>
      %cst_22 = arith.constant dense<0.000000e+00> : vector<128xf32>
      %52 = vector.multi_reduction <add>, %51, %cst_22 [1] : vector<128x128xf32> to vector<128xf32>
      %53 = vector.shape_cast %52 : vector<128xf32> to vector<128x1xf32>
      %cst_23 = arith.constant 1.000000e-24 : f32
      %54 = vector.broadcast %cst_23 : f32 to vector<128x1xf32>
      %55 = arith.maximumf %53, %54 : vector<128x1xf32>
      %56 = math.rsqrt %55 : vector<128x1xf32>
      %57 = vector.broadcast %56 : vector<128x1xf32> to vector<128x128xf32>
      %58 = arith.mulf %50, %57 : vector<128x128xf32>
      %c0_24 = arith.constant 0 : index
      %c0_25 = arith.constant 0 : index
      %59 = vector.load %arg5[%c0_24, %c0_25] : memref<128x128xf32, #tpu.memory_space<vmem>>, vector<128x128xf32>
      tpu.vector_store %arg5[%c0_24, %c0_25], %58 {strides = array<i32>} : memref<128x128xf32, #tpu.memory_space<vmem>>, vector<128x128xf32>,
      %cst_26 = arith.constant 0.000000e+00 : f32
      %60 = vector.broadcast %cst_26 : f32 to vector<1x1xf32>
      %c0_27 = arith.constant 0 : index
      %c0_28 = arith.constant 0 : index
      %61 = vector.load %arg4[%c0_27, %c0_28] : memref<1x1xf32, #tpu.memory_space<vmem>>, vector<1x1xf32>
      tpu.vector_store %arg4[%c0_27, %c0_28], %60 {strides = array<i32>} : memref<1x1xf32, #tpu.memory_space<vmem>>, vector<1x1xf32>,
    } else {
    }
    %c0 = arith.constant 0 : index
    %c0_1 = arith.constant 0 : index
    %3 = vector.load %arg1[%c0, %c0_1] : memref<32x128xf32, #tpu.memory_space<vmem>>, vector<32x128xf32>
    %4 = arith.mulf %3, %3 : vector<32x128xf32>
    %cst = arith.constant dense<0.000000e+00> : vector<32xf32>
    %5 = vector.multi_reduction <add>, %4, %cst [1] : vector<32x128xf32> to vector<32xf32>
    %6 = vector.shape_cast %5 : vector<32xf32> to vector<32x1xf32>
    %cst_2 = arith.constant 1.000000e-24 : f32
    %7 = vector.broadcast %cst_2 : f32 to vector<32x1xf32>
    %8 = arith.maximumf %6, %7 : vector<32x1xf32>
    %9 = math.rsqrt %8 : vector<32x1xf32>
    %10 = vector.broadcast %9 : vector<32x1xf32> to vector<32x128xf32>
    %11 = arith.mulf %3, %10 : vector<32x128xf32>
    %c0_3 = arith.constant 0 : index
    %c0_4 = arith.constant 0 : index
    %12 = vector.load %arg5[%c0_3, %c0_4] : memref<128x128xf32, #tpu.memory_space<vmem>>, vector<128x128xf32>
    %cst_5 = arith.constant dense<0.000000e+00> : vector<32x128xf32>
    %13 = tpu.matmul %11, %12, %cst_5 {dimension_numbers = #tpu.dot_dimension_numbers<[1], [1], [0], [0], [0, 0, 1, 0], [], []>} : vector<32x128xf32>, vector<128x128xf32>, vector<32x128xf32> -> vector<32x128xf32>
    %cst_6 = arith.constant 6.400000e+01 : f32
    %14 = vector.broadcast %cst_6 : f32 to vector<32x128xf32>
    %15 = arith.mulf %14, %13 : vector<32x128xf32>
    %16 = tpu.iota {dimensions = array<i32: 1>} : vector<32x128xi32>
    %c16_i32 = arith.constant 16 : i32
    %17 = vector.broadcast %c16_i32 : i32 to vector<32x128xi32>
    %18 = arith.cmpi slt, %16, %17 : vector<32x128xi32>
    %cst_7 = arith.constant -1.000000e+30 : f32
    %19 = vector.broadcast %cst_7 : f32 to vector<32x128xf32>
    %20 = arith.select %18, %15, %19 : vector<32x128xi1>, vector<32x128xf32>
    %c0_8 = arith.constant 0 : index
    %c0_9 = arith.constant 0 : index
    %21 = vector.load %arg2[%c0_8, %c0_9] : memref<32x1xi32, #tpu.memory_space<vmem>>, vector<32x1xi32>
    %22 = vector.broadcast %21 : vector<32x1xi32> to vector<32x128xi32>
    %23 = arith.cmpi eq, %16, %22 : vector<32x128xi32>
    %24 = arith.extui %23 : vector<32x128xi1> to vector<32x128xi32>
    %25 = arith.sitofp %24 : vector<32x128xi32> to vector<32x128xf32>
    %cst_10 = arith.constant dense<0xFF800000> : vector<32xf32>
    %26 = vector.multi_reduction <maximumf>, %20, %cst_10 [1] : vector<32x128xf32> to vector<32xf32>
    %27 = vector.shape_cast %26 : vector<32xf32> to vector<32x1xf32>
    %28 = vector.broadcast %27 : vector<32x1xf32> to vector<32x128xf32>
    %29 = arith.subf %20, %28 : vector<32x128xf32>
    %30 = math.exp %29 : vector<32x128xf32>
    %cst_11 = arith.constant dense<0.000000e+00> : vector<32xf32>
    %31 = vector.multi_reduction <add>, %30, %cst_11 [1] : vector<32x128xf32> to vector<32xf32>
    %32 = vector.shape_cast %31 : vector<32xf32> to vector<32x1xf32>
    %33 = math.log %32 : vector<32x1xf32>
    %34 = arith.addf %33, %27 : vector<32x1xf32>
    %35 = arith.mulf %20, %25 : vector<32x128xf32>
    %cst_12 = arith.constant dense<0.000000e+00> : vector<32xf32>
    %36 = vector.multi_reduction <add>, %35, %cst_12 [1] : vector<32x128xf32> to vector<32xf32>
    %37 = vector.shape_cast %36 : vector<32xf32> to vector<32x1xf32>
    %38 = arith.subf %34, %37 : vector<32x1xf32>
    %c0_13 = arith.constant 0 : index
    %c0_14 = arith.constant 0 : index
    %39 = vector.load %arg4[%c0_13, %c0_14] : memref<1x1xf32, #tpu.memory_space<vmem>>, vector<1x1xf32>
    %40 = vector.shape_cast %38 : vector<32x1xf32> to vector<1x32x1xf32>
    %cst_15 = arith.constant dense<0.000000e+00> : vector<1xf32>
    %41 = vector.multi_reduction <add>, %40, %cst_15 [1, 2] : vector<1x32x1xf32> to vector<1xf32>
    %42 = vector.shape_cast %41 : vector<1xf32> to vector<1x1x1xf32>
    %43 = vector.extract %42[0, 0, 0] : f32 from vector<1x1x1xf32>
    %44 = vector.broadcast %43 : f32 to vector<1x1xf32>
    %45 = arith.addf %39, %44 : vector<1x1xf32>
    %c0_16 = arith.constant 0 : index
    %c0_17 = arith.constant 0 : index
    %46 = vector.load %arg4[%c0_16, %c0_17] : memref<1x1xf32, #tpu.memory_space<vmem>>, vector<1x1xf32>
    tpu.vector_store %arg4[%c0_16, %c0_17], %45 {strides = array<i32>} : memref<1x1xf32, #tpu.memory_space<vmem>>, vector<1x1xf32>,
    %c0_i32_18 = arith.constant 0 : i32
    %47 = arith.cmpi eq, %arg0, %c0_i32_18 : i32
    %48 = arith.extui %47 : i1 to i32
    %c0_i32_19 = arith.constant 0 : i32
    %49 = arith.cmpi ne, %48, %c0_i32_19 : i32
    scf.if %49 {
      %c0_20 = arith.constant 0 : index
      %c0_21 = arith.constant 0 : index
      %50 = vector.load %arg4[%c0_20, %c0_21] : memref<1x1xf32, #tpu.memory_space<vmem>>, vector<1x1xf32>
      %cst_22 = arith.constant 3.125000e-02 : f32
      %51 = vector.broadcast %cst_22 : f32 to vector<1x1xf32>
      %52 = arith.mulf %50, %51 : vector<1x1xf32>
      %c0_23 = arith.constant 0 : index
      %c0_24 = arith.constant 0 : index
      %53 = vector.load %arg4[%c0_23, %c0_24] : memref<1x1xf32, #tpu.memory_space<vmem>>, vector<1x1xf32>
      tpu.vector_store %arg4[%c0_23, %c0_24], %52 {strides = array<i32>} : memref<1x1xf32, #tpu.memory_space<vmem>>, vector<1x1xf32>,
    } else {
    }
    return
  }
  func.func @transform_0(%arg0: i32) -> (i32, i32) {
    %c0_i32 = arith.constant 0 : i32
    %c0_i32_0 = arith.constant 0 : i32
    return %arg0, %c0_i32 : i32, i32
  }
  func.func @transform_1(%arg0: i32) -> (i32, i32) {
    %c0_i32 = arith.constant 0 : i32
    %c0_i32_0 = arith.constant 0 : i32
    return %arg0, %c0_i32 : i32, i32
  }
  func.func @transform_2(%arg0: i32) -> (i32, i32) {
    %c0_i32 = arith.constant 0 : i32
    %c0_i32_0 = arith.constant 0 : i32
    %c0_i32_1 = arith.constant 0 : i32
    return %c0_i32, %c0_i32_0 : i32, i32
  }
  func.func @transform_3(%arg0: i32) -> (i32, i32) {
    %c0_i32 = arith.constant 0 : i32
    %c0_i32_0 = arith.constant 0 : i32
    %c0_i32_1 = arith.constant 0 : i32
    return %c0_i32, %c0_i32_0 : i32, i32
  }
}

</mosaic_0001>

<llo_original>
// kernel: tpu_custom_call.1
$region0: #{tpu_custom_call.1}
  #allocation0 [shape = 'u32[]', space=smem, size = 0x4, offset = 0x4, fixed_abs, tag = 'smem constant byte address 0x4 - core index']
  #allocation1 [shape = 'u32[144,128]{1,0:T(1,128)}', space=vmem, size = 0x12000, scoped, tag = 'internal scratch']
  #allocation2 [shape = 'f32[128,128]{1,0:T(8,128)}', space=vmem, size = 0x10000, scoped, tag = 'scratch operand']
  %s0 = inlined_call_operand.vmem [shape: f32[32,128], index: 0, kind: input, shape index: {}]
  %s1 = inlined_call_operand.vmem [shape: s32[32,1], index: 1, kind: input, shape index: {}]
  %s2 = inlined_call_operand.hbm [shape: f32[128,128], index: 2, kind: input, shape index: {}]
  %s3 = inlined_call_operand.hbm [shape: f32[1,1], index: 3, kind: output, shape index: {}]
  %s4 = sld [smem:[#allocation0]]
  $region34: #{tpu_custom_call.1} parent=0
    _
  %s6 = ssub.s32 1, %s4
  %s7 = scalar_select 0, %s6, %s4
  $region1: #{tpu_custom_call.1} parent=0
    #allocation3 [shape = 'u8[65536]{0}', space=vmem, size = 0x10000, scoped, tag = 'input window, operand 2, single buffered']
    #allocation4 [shape = 's32[1]{0}', space=sflag, size = 0x4, scoped, tag = 'scoped memory for tpu_custom_call.1']
    #allocation5 [shape = 's32[1]{0}', space=sflag, size = 0x4, scoped, tag = 'scoped memory for tpu_custom_call.1']
    #allocation6 [shape = 'u8[512]{0}', space=vmem, size = 0x400, scoped, tag = 'output window, operand 0, single buffered']
    %8 = vsyncpa [#allocation4], 0
    %9 = vsyncpa [#allocation5], 0
    // Predicated region
    $region2: #{tpu_custom_call.1} parent=1 // pred_check
      _
    $region3: #{tpu_custom_call.1} parent=1 // pred_check_branch
      %11 = sbr.rel (0) target = $region5
    $region4: #{tpu_custom_call.1} parent=1 // pred_region
      _
    $region5: #{tpu_custom_call.1} parent=1 // pred_fallthru
      _
    // Predicated region
    $region6: #{tpu_custom_call.1} parent=1 // pred_check
      _
    $region7: #{tpu_custom_call.1} parent=1 // pred_check_branch
      %13 = sbr.rel (0) target = $region9
    $region8: #{tpu_custom_call.1} parent=1 // pred_region
      _
    $region9: #{tpu_custom_call.1} parent=1 // pred_fallthru
      _
    // Predicated region
    $region10: #{tpu_custom_call.1} parent=1 // pred_check
      _
    $region11: #{tpu_custom_call.1} parent=1 // pred_check_branch
      %15 = sbr.rel (0) target = $region13
    $region12: #{tpu_custom_call.1} parent=1 // pred_region
      %s17 = ssub.s32 2048, 2048
      %18 = vsyncadd [#allocation4], %s17
      %s19 = sshll.u32 [#allocation3], 4
      %s20 = int_to_ptr.vmem [resolvable:$true] %s19
      %25 = dma.hbm_to_vmem [thread:$0]  %s2, 2048, %s20, [#allocation4], 128, 128, 8
    $region13: #{tpu_custom_call.1} parent=1 // pred_fallthru
      _
    // Predicated region
    $region14: #{tpu_custom_call.1} parent=1 // pred_check
      _
    $region15: #{tpu_custom_call.1} parent=1 // pred_check_branch
      %27 = sbr.rel (0) target = $region17
    $region16: #{tpu_custom_call.1} parent=1 // pred_region
      %28 = dma.done [#allocation4], 2048
    $region17: #{tpu_custom_call.1} parent=1 // pred_fallthru
      _
    %p29 = scmp.eq.s32.totalorder 0, 0
    // Predicated region
    $region18: #{tpu_custom_call.1} parent=1 // pred_check
      %p30 = pneg %p29
    $region19: #{tpu_custom_call.1} parent=1 // pred_check_branch
      %32 = sbr.rel (%p30) target = $region21
    $region20: #{tpu_custom_call.1} parent=1 // pred_region
      %v33 = vld [vmem:[#allocation3] sm:$0xff]
      %v34 = vld [vmem:[#allocation3 + $0x8] sm:$0xff]
      %v35 = vld [vmem:[#allocation3 + $0x10] sm:$0xff]
      %v36 = vld [vmem:[#allocation3 + $0x18] sm:$0xff]
      %v37 = vld [vmem:[#allocation3 + $0x20] sm:$0xff]
      %v38 = vld [vmem:[#allocation3 + $0x28] sm:$0xff]
      %v39 = vld [vmem:[#allocation3 + $0x30] sm:$0xff]
      %v40 = vld [vmem:[#allocation3 + $0x38] sm:$0xff]
      %v41 = vld [vmem:[#allocation3 + $0x40] sm:$0xff]
      %v42 = vld [vmem:[#allocation3 + $0x48] sm:$0xff]
      %v43 = vld [vmem:[#allocation3 + $0x50] sm:$0xff]
      %v44 = vld [vmem:[#allocation3 + $0x58] sm:$0xff]
      %v45 = vld [vmem:[#allocation3 + $0x60] sm:$0xff]
      %v46 = vld [vmem:[#allocation3 + $0x68] sm:$0xff]
      %v47 = vld [vmem:[#allocation3 + $0x70] sm:$0xff]
      %v48 = vld [vmem:[#allocation3 + $0x78] sm:$0xff]
      %v49 = vmul.f32 %v33, %v33
      %v50 = vmul.f32 %v34, %v34
      %v51 = vmul.f32 %v35, %v35
      %v52 = vmul.f32 %v36, %v36
      %v53 = vmul.f32 %v37, %v37
      %v54 = vmul.f32 %v38, %v38
      %v55 = vmul.f32 %v39, %v39
      %v56 = vmul.f32 %v40, %v40
      %v57 = vmul.f32 %v41, %v41
      %v58 = vmul.f32 %v42, %v42
      %v59 = vmul.f32 %v43, %v43
      %v60 = vmul.f32 %v44, %v44
      %v61 = vmul.f32 %v45, %v45
      %v62 = vmul.f32 %v46, %v46
      %v63 = vmul.f32 %v47, %v47
      %v64 = vmul.f32 %v48, %v48
      %65 = vadd.xlane.f32.xlu0 %v49
      %v66 = vpop.xlane.xlu0 %65
      %67 = vadd.xlane.f32.xlu0 %v50
      %v68 = vpop.xlane.xlu0 %67
      %69 = vadd.xlane.f32.xlu0 %v51
      %v70 = vpop.xlane.xlu0 %69
      %71 = vadd.xlane.f32.xlu0 %v52
      %v72 = vpop.xlane.xlu0 %71
      %73 = vadd.xlane.f32.xlu0 %v53
      %v74 = vpop.xlane.xlu0 %73
      %75 = vadd.xlane.f32.xlu0 %v54
      %v76 = vpop.xlane.xlu0 %75
      %77 = vadd.xlane.f32.xlu0 %v55
      %v78 = vpop.xlane.xlu0 %77
      %79 = vadd.xlane.f32.xlu0 %v56
      %v80 = vpop.xlane.xlu0 %79
      %81 = vadd.xlane.f32.xlu0 %v57
      %v82 = vpop.xlane.xlu0 %81
      %83 = vadd.xlane.f32.xlu0 %v58
      %v84 = vpop.xlane.xlu0 %83
      %85 = vadd.xlane.f32.xlu0 %v59
      %v86 = vpop.xlane.xlu0 %85
      %87 = vadd.xlane.f32.xlu0 %v60
      %v88 = vpop.xlane.xlu0 %87
      %89 = vadd.xlane.f32.xlu0 %v61
      %v90 = vpop.xlane.xlu0 %89
      %91 = vadd.xlane.f32.xlu0 %v62
      %v92 = vpop.xlane.xlu0 %91
      %93 = vadd.xlane.f32.xlu0 %v63
      %v94 = vpop.xlane.xlu0 %93
      %95 = vadd.xlane.f32.xlu0 %v64
      %v96 = vpop.xlane.xlu0 %95
      %v97 = vmax.f32 %v66, 1e-24
      %v98 = vmax.f32 %v68, 1e-24
      %v99 = vmax.f32 %v70, 1e-24
      %v100 = vmax.f32 %v72, 1e-24
      %v101 = vmax.f32 %v74, 1e-24
      %v102 = vmax.f32 %v76, 1e-24
      %v103 = vmax.f32 %v78, 1e-24
      %v104 = vmax.f32 %v80, 1e-24
      %v105 = vmax.f32 %v82, 1e-24
      %v106 = vmax.f32 %v84, 1e-24
      %v107 = vmax.f32 %v86, 1e-24
      %v108 = vmax.f32 %v88, 1e-24
      %v109 = vmax.f32 %v90, 1e-24
      %v110 = vmax.f32 %v92, 1e-24
      %v111 = vmax.f32 %v94, 1e-24
      %v112 = vmax.f32 %v96, 1e-24
      %v113 = vrsqrt.pop %v97
      %v114 = vrsqrt.pop %v98
      %v115 = vrsqrt.pop %v99
      %v116 = vrsqrt.pop %v100
      %v117 = vrsqrt.pop %v101
      %v118 = vrsqrt.pop %v102
      %v119 = vrsqrt.pop %v103
      %v120 = vrsqrt.pop %v104
      %v121 = vrsqrt.pop %v105
      %v122 = vrsqrt.pop %v106
      %v123 = vrsqrt.pop %v107
      %v124 = vrsqrt.pop %v108
      %v125 = vrsqrt.pop %v109
      %v126 = vrsqrt.pop %v110
      %v127 = vrsqrt.pop %v111
      %v128 = vrsqrt.pop %v112
      %v129 = vmul.f32 %v33, %v113
      %v130 = vmul.f32 %v34, %v114
      %v131 = vmul.f32 %v35, %v115
      %v132 = vmul.f32 %v36, %v116
      %v133 = vmul.f32 %v37, %v117
      %v134 = vmul.f32 %v38, %v118
      %v135 = vmul.f32 %v39, %v119
      %v136 = vmul.f32 %v40, %v120
      %v137 = vmul.f32 %v41, %v121
      %v138 = vmul.f32 %v42, %v122
      %v139 = vmul.f32 %v43, %v123
      %v140 = vmul.f32 %v44, %v124
      %v141 = vmul.f32 %v45, %v125
      %v142 = vmul.f32 %v46, %v126
      %v143 = vmul.f32 %v47, %v127
      %v144 = vmul.f32 %v48, %v128
      %145 = vst [vmem:[#allocation2] sm:$0xff] %v129
      %146 = vst [vmem:[#allocation2 + $0x8] sm:$0xff] %v130
      %147 = vst [vmem:[#allocation2 + $0x10] sm:$0xff] %v131
      %148 = vst [vmem:[#allocation2 + $0x18] sm:$0xff] %v132
      %149 = vst [vmem:[#allocation2 + $0x20] sm:$0xff] %v133
      %150 = vst [vmem:[#allocation2 + $0x28] sm:$0xff] %v134
      %151 = vst [vmem:[#allocation2 + $0x30] sm:$0xff] %v135
      %152 = vst [vmem:[#allocation2 + $0x38] sm:$0xff] %v136
      %153 = vst [vmem:[#allocation2 + $0x40] sm:$0xff] %v137
      %154 = vst [vmem:[#allocation2 + $0x48] sm:$0xff] %v138
      %155 = vst [vmem:[#allocation2 + $0x50] sm:$0xff] %v139
      %156 = vst [vmem:[#allocation2 + $0x58] sm:$0xff] %v140
      %157 = vst [vmem:[#allocation2 + $0x60] sm:$0xff] %v141
      %158 = vst [vmem:[#allocation2 + $0x68] sm:$0xff] %v142
      %159 = vst [vmem:[#allocation2 + $0x70] sm:$0xff] %v143
      %160 = vst [vmem:[#allocation2 + $0x78] sm:$0xff] %v144
      %vm161 = vcmask 0
      %162 = vst.msk [vmem:[#allocation6] sm:$0x1] %vm161, 0.0
    $region21: #{tpu_custom_call.1} parent=1 // pred_fallthru
      _
    %v163 = vld [vmem:[%s0] sm:$0xff]
    %v164 = vld [vmem:[%s0 + $0x8] sm:$0xff]
    %v165 = vld [vmem:[%s0 + $0x10] sm:$0xff]
    %v166 = vld [vmem:[%s0 + $0x18] sm:$0xff]
    %v167 = vmul.f32 %v163, %v163
    %v168 = vmul.f32 %v164, %v164
    %v169 = vmul.f32 %v165, %v165
    %v170 = vmul.f32 %v166, %v166
    %171 = vadd.xlane.f32.xlu0 %v167
    %v172 = vpop.xlane.xlu0 %171
    %173 = vadd.xlane.f32.xlu0 %v168
    %v174 = vpop.xlane.xlu0 %173
    %175 = vadd.xlane.f32.xlu0 %v169
    %v176 = vpop.xlane.xlu0 %175
    %177 = vadd.xlane.f32.xlu0 %v170
    %v178 = vpop.xlane.xlu0 %177
    %v179 = vmax.f32 %v172, 1e-24
    %v180 = vmax.f32 %v174, 1e-24
    %v181 = vmax.f32 %v176, 1e-24
    %v182 = vmax.f32 %v178, 1e-24
    %v183 = vrsqrt.pop %v179
    %v184 = vrsqrt.pop %v180
    %v185 = vrsqrt.pop %v181
    %v186 = vrsqrt.pop %v182
    %v187 = vmul.f32 %v163, %v183
    %v188 = vmul.f32 %v164, %v184
    %v189 = vmul.f32 %v165, %v185
    %v190 = vmul.f32 %v166, %v186
    %v191 = vld [vmem:[#allocation2] sm:$0xff]
    %v192 = vld [vmem:[#allocation2 + $0x8] sm:$0xff]
    %v193 = vld [vmem:[#allocation2 + $0x10] sm:$0xff]
    %v194 = vld [vmem:[#allocation2 + $0x18] sm:$0xff]
    %v195 = vld [vmem:[#allocation2 + $0x20] sm:$0xff]
    %v196 = vld [vmem:[#allocation2 + $0x28] sm:$0xff]
    %v197 = vld [vmem:[#allocation2 + $0x30] sm:$0xff]
    %v198 = vld [vmem:[#allocation2 + $0x38] sm:$0xff]
    %v199 = vld [vmem:[#allocation2 + $0x40] sm:$0xff]
    %v200 = vld [vmem:[#allocation2 + $0x48] sm:$0xff]
    %v201 = vld [vmem:[#allocation2 + $0x50] sm:$0xff]
    %v202 = vld [vmem:[#allocation2 + $0x58] sm:$0xff]
    %v203 = vld [vmem:[#allocation2 + $0x60] sm:$0xff]
    %v204 = vld [vmem:[#allocation2 + $0x68] sm:$0xff]
    %v205 = vld [vmem:[#allocation2 + $0x70] sm:$0xff]
    %v206 = vld [vmem:[#allocation2 + $0x78] sm:$0xff]
    %207 = vmatprep.subr.mxu0 0.0
    %208 = vmatpush1.xpose.msra.mxu0 %v191
    %209 = vmatprep.subr.mxu0 0.0
    %210 = vmatpush1.xpose.msra.mxu0 %v192
    %211 = vmatprep.subr.mxu0 0.0
    %212 = vmatpush1.xpose.msra.mxu0 %v193
    %213 = vmatprep.subr.mxu0 0.0
    %214 = vmatpush1.xpose.msra.mxu0 %v194
    %215 = vmatprep.subr.mxu0 0.0
    %216 = vmatpush1.xpose.msra.mxu0 %v195
    %217 = vmatprep.subr.mxu0 0.0
    %218 = vmatpush1.xpose.msra.mxu0 %v196
    %219 = vmatprep.subr.mxu0 0.0
    %220 = vmatpush1.xpose.msra.mxu0 %v197
    %221 = vmatprep.subr.mxu0 0.0
    %222 = vmatpush1.xpose.msra.mxu0 %v198
    %223 = vmatprep.subr.mxu0 0.0
    %224 = vmatpush1.xpose.msra.mxu0 %v199
    %225 = vmatprep.subr.mxu0 0.0
    %226 = vmatpush1.xpose.msra.mxu0 %v200
    %227 = vmatprep.subr.mxu0 0.0
    %228 = vmatpush1.xpose.msra.mxu0 %v201
    %229 = vmatprep.subr.mxu0 0.0
    %230 = vmatpush1.xpose.msra.mxu0 %v202
    %231 = vmatprep.subr.mxu0 0.0
    %232 = vmatpush1.xpose.msra.mxu0 %v203
    %233 = vmatprep.subr.mxu0 0.0
    %234 = vmatpush1.xpose.msra.mxu0 %v204
    %235 = vmatprep.subr.mxu0 0.0
    %236 = vmatpush1.xpose.msra.mxu0 %v205
    %237 = vmatprep.subr.mxu0 0.0
    %238 = vmatpush1.xpose.msra.mxu0 %v206
    %239 = vmatprep.subr.mxu0 0.0
    %240 = vmatpush1.xpose.msra.mxu0 0.0
    %241 = vmatprep.subr.mxu0 0.0
    %242 = vmatpush1.xpose.msra.mxu0 0.0
    %243 = vmatprep.subr.mxu0 0.0
    %244 = vmatpush1.xpose.msra.mxu0 0.0
    %245 = vmatprep.subr.mxu0 0.0
    %246 = vmatpush1.xpose.msra.mxu0 0.0
    %247 = vmatprep.subr.mxu0 0.0
    %248 = vmatpush1.xpose.msra.mxu0 0.0
    %249 = vmatprep.subr.mxu0 0.0
    %250 = vmatpush1.xpose.msra.mxu0 0.0
    %251 = vmatprep.subr.mxu0 0.0
    %252 = vmatpush1.xpose.msra.mxu0 0.0
    %253 = vmatprep.subr.mxu0 0.0
    %254 = vmatpush1.xpose.msra.mxu0 0.0
    %255 = vmatprep.subr.mxu0 0.0
    %256 = vmatpush1.xpose.msra.mxu0 0.0
    %257 = vmatprep.subr.mxu0 0.0
    %258 = vmatpush1.xpose.msra.mxu0 0.0
    %259 = vmatprep.subr.mxu0 0.0
    %260 = vmatpush1.xpose.msra.mxu0 0.0
    %261 = vmatprep.subr.mxu0 0.0
    %262 = vmatpush1.xpose.msra.mxu0 0.0
    %263 = vmatprep.subr.mxu0 0.0
    %264 = vmatpush1.xpose.msra.mxu0 0.0
    %265 = vmatprep.subr.mxu0 0.0
    %266 = vmatpush1.xpose.msra.mxu0 0.0
    %267 = vmatprep.subr.mxu0 0.0
    %268 = vmatpush1.xpose.msra.mxu0 0.0
    %269 = vmatprep.subr.mxu0 0.0
    %270 = vmatpush1.xpose.msra.mxu0 0.0
    %271 = vmatprep.mubr.f32.mxu0 0.0
    %272 = vmatmul.mubr.f32.gmra.mrb[0].mxu0 %v187
    %v273 = vpop.f32.mrb[0].mxu0
    %v274 = vadd.f32 0.0, %v273
    %v275 = vpop.f32.mrb[0].mxu0
    %276 = vmatprep.mubr.f32.mxu0 0.0
    %277 = vmatmul.mubr.f32.gmra.mrb[0].mxu0 %v188
    %v278 = vpop.f32.mrb[0].mxu0
    %v279 = vadd.f32 0.0, %v278
    %v280 = vpop.f32.mrb[0].mxu0
    %281 = vmatprep.mubr.f32.mxu0 0.0
    %282 = vmatmul.mubr.f32.gmra.mrb[0].mxu0 %v189
    %v283 = vpop.f32.mrb[0].mxu0
    %v284 = vadd.f32 0.0, %v283
    %v285 = vpop.f32.mrb[0].mxu0
    %286 = vmatprep.mubr.f32.mxu0 0.0
    %287 = vmatmul.mubr.f32.gmra.mrb[0].mxu0 %v190
    %v288 = vpop.f32.mrb[0].mxu0
    %v289 = vadd.f32 0.0, %v288
    %v290 = vpop.f32.mrb[0].mxu0
    %291 = vdwg.mxu0
    %v292 = vmul.f32 %v274, 64.0
    %v293 = vmul.f32 %v279, 64.0
    %v294 = vmul.f32 %v284, 64.0
    %v295 = vmul.f32 %v289, 64.0
    %v296 = vlaneseq
    %v297 = vand.u32 %v296, 127
    %vm298 = vcmp.lt.s32.totalorder %v297, 16
    %v299 = vsel %vm298, %v292, -1e+30
    %v300 = vsel %vm298, %v293, -1e+30
    %v301 = vsel %vm298, %v294, -1e+30
    %v302 = vsel %vm298, %v295, -1e+30
    %v303 = vld [vmem:[%s1] sm:$0xff]
    %v304 = vld [vmem:[%s1 + $0x8] sm:$0xff]
    %v305 = vld [vmem:[%s1 + $0x10] sm:$0xff]
    %v306 = vld [vmem:[%s1 + $0x18] sm:$0xff]
    %307 = vset.pattern.permute.xlu0 0
    %308 = vperm.xlu0 %307, %v303
    %v309 = vpop.permute.xlu0 %308
    %310 = vset.pattern.permute.xlu0 0
    %311 = vperm.xlu0 %310, %v304
    %v312 = vpop.permute.xlu0 %311
    %313 = vset.pattern.permute.xlu0 0
    %314 = vperm.xlu0 %313, %v305
    %v315 = vpop.permute.xlu0 %314
    %316 = vset.pattern.permute.xlu0 0
    %317 = vperm.xlu0 %316, %v306
    %v318 = vpop.permute.xlu0 %317
    %vm319 = vcmp.eq.s32.totalorder %v297, %v309
    %vm320 = vcmp.eq.s32.totalorder %v297, %v312
    %vm321 = vcmp.eq.s32.totalorder %v297, %v315
    %vm322 = vcmp.eq.s32.totalorder %v297, %v318
    %v323 = vsel %vm319, 1, 0
    %v324 = vsel %vm320, 1, 0
    %v325 = vsel %vm321, 1, 0
    %v326 = vsel %vm322, 1, 0
    %v327 = vcvt.s32.f32 %v323
    %v328 = vcvt.s32.f32 %v324
    %v329 = vcvt.s32.f32 %v325
    %v330 = vcvt.s32.f32 %v326
    %331 = vmax.xlane.f32.xlu0 %v299
    %v332 = vpop.xlane.xlu0 %331
    %333 = vmax.xlane.f32.xlu0 %v300
    %v334 = vpop.xlane.xlu0 %333
    %335 = vmax.xlane.f32.xlu0 %v301
    %v336 = vpop.xlane.xlu0 %335
    %337 = vmax.xlane.f32.xlu0 %v302
    %v338 = vpop.xlane.xlu0 %337
    %v339 = vsub.f32 %v299, %v332
    %v340 = vsub.f32 %v300, %v334
    %v341 = vsub.f32 %v301, %v336
    %v342 = vsub.f32 %v302, %v338
    %v343 = vmul.f32 %v339, 1.442695
    %v344 = vpow.pop %v343
    %v345 = vmul.f32 %v340, 1.442695
    %v346 = vpow.pop %v345
    %v347 = vmul.f32 %v341, 1.442695
    %v348 = vpow.pop %v347
    %v349 = vmul.f32 %v342, 1.442695
    %v350 = vpow.pop %v349
    %351 = vadd.xlane.f32.xlu0 %v344
    %v352 = vpop.xlane.xlu0 %351
    %353 = vadd.xlane.f32.xlu0 %v346
    %v354 = vpop.xlane.xlu0 %353
    %355 = vadd.xlane.f32.xlu0 %v348
    %v356 = vpop.xlane.xlu0 %355
    %357 = vadd.xlane.f32.xlu0 %v350
    %v358 = vpop.xlane.xlu0 %357
    %v359 = vlog2.pop %v352
    %v360 = vmul.f32 %v359, 0.6931472
    %v361 = vlog2.pop %v354
    %v362 = vmul.f32 %v361, 0.6931472
    %v363 = vlog2.pop %v356
    %v364 = vmul.f32 %v363, 0.6931472
    %v365 = vlog2.pop %v358
    %v366 = vmul.f32 %v365, 0.6931472
    %v367 = vadd.f32 %v360, %v332
    %v368 = vadd.f32 %v362, %v334
    %v369 = vadd.f32 %v364, %v336
    %v370 = vadd.f32 %v366, %v338
    %v371 = vmul.f32 %v299, %v327
    %v372 = vmul.f32 %v300, %v328
    %v373 = vmul.f32 %v301, %v329
    %v374 = vmul.f32 %v302, %v330
    %375 = vadd.xlane.f32.xlu0 %v371
    %v376 = vpop.xlane.xlu0 %375
    %377 = vadd.xlane.f32.xlu0 %v372
    %v378 = vpop.xlane.xlu0 %377
    %379 = vadd.xlane.f32.xlu0 %v373
    %v380 = vpop.xlane.xlu0 %379
    %381 = vadd.xlane.f32.xlu0 %v374
    %v382 = vpop.xlane.xlu0 %381
    %v383 = vsub.f32 %v367, %v376
    %v384 = vsub.f32 %v368, %v378
    %v385 = vsub.f32 %v369, %v380
    %v386 = vsub.f32 %v370, %v382
    %v387 = vld [vmem:[#allocation6] sm:$0x1]
    %vm388 = vcmask 7168
    %v389 = vsel %vm388, %v383, 0.0
    %v390 = vsel %vm388, %v384, 0.0
    %v391 = vadd.f32 %v389, %v390
    %v392 = vsel %vm388, %v385, 0.0
    %v393 = vadd.f32 %v391, %v392
    %v394 = vsel %vm388, %v386, 0.0
    %v395 = vadd.f32 %v393, %v394
    %396 = vadd.xlane.f32.xlu0 %v395
    %v397 = vpop.xlane.xlu0 %396
    %v398 = vrot.slane %v397, 4
    %v399 = vadd.f32 %v397, %v398
    %v400 = vrot.slane %v399, 2
    %v401 = vadd.f32 %v399, %v400
    %v402 = vrot.slane %v401, 1
    %v403 = vadd.f32 %v401, %v402
    %s404 = vtos %v403
    %v405 = vstv %s404
    %v406 = vadd.f32 %v387, %v405
    %vm407 = vcmask 0
    %408 = vst.msk [vmem:[#allocation6] sm:$0x1] %vm407, %v406
    // Predicated region
    $region22: #{tpu_custom_call.1} parent=1 // pred_check
      %p409 = pneg %p29
    $region23: #{tpu_custom_call.1} parent=1 // pred_check_branch
      %411 = sbr.rel (%p409) target = $region25
    $region24: #{tpu_custom_call.1} parent=1 // pred_region
      %v412 = vld [vmem:[#allocation6] sm:$0x1]
      %v413 = vmul.f32 %v412, 0.03125
      %414 = vst.msk [vmem:[#allocation6] sm:$0x1] %vm407, %v413
    $region25: #{tpu_custom_call.1} parent=1 // pred_fallthru
      _
    // Predicated region
    $region26: #{tpu_custom_call.1} parent=1 // pred_check
      _
    $region27: #{tpu_custom_call.1} parent=1 // pred_check_branch
      %416 = sbr.rel (0) target = $region29
    $region28: #{tpu_custom_call.1} parent=1 // pred_region
      %s418 = ssub.s32 16, 16
      %419 = vsyncadd [#allocation5], %s418
      %s421 = sshll.u32 [#allocation6], 4
      %s422 = int_to_ptr.vmem [resolvable:$true] %s421
      %424 = dma.vmem_to_hbm [thread:$0]  %s422, 16, %s3, [#allocation5]
    $region29: #{tpu_custom_call.1} parent=1 // pred_fallthru
      _
    // Predicated region
    $region30: #{tpu_custom_call.1} parent=1 // pred_check
      _
    $region31: #{tpu_custom_call.1} parent=1 // pred_check_branch
      %426 = sbr.rel (0) target = $region33
    $region32: #{tpu_custom_call.1} parent=1 // pred_region
      %427 = dma.done [#allocation5], 16
    $region33: #{tpu_custom_call.1} parent=1 // pred_fallthru
      _
    %428 = vsyncpa [#allocation4], 1
    %429 = vsyncpa [#allocation5], 1

</llo_original>
